<compile_context>
chip_gen: v5e
topology: v5e:2x2
jax: 0.10.0
libtpu: 0.0.40
codegen_flags: <defaults>
</compile_context>

<pallas_src>
import functools

import jax
import jax.numpy as jnp
from jax.experimental import pallas as pl
from jax.experimental.pallas import tpu as pltpu


def _round_up(x, m):
    return (x + m - 1) // m * m


def _lane_shift(v, s):
    """u[:, l] = v[:, l + s] where valid, zero outside (s is a static int)."""
    c, l = v.shape
    if s == 0:
        return v
    zeros = jnp.zeros((c, abs(s)), v.dtype)
    if s > 0:
        return jnp.concatenate([v[:, s:], zeros], axis=1)
    return jnp.concatenate([zeros, v[:, :l + s]], axis=1)


def _im2col(v, K, dil, pad):
    """(C, L) -> (K*C, L); rows [k*C : (k+1)*C] hold v shifted by k*dil - pad."""
    if K == 1:
        return v
    return jnp.concatenate(
        [_lane_shift(v, k * dil - pad) for k in range(K)], axis=0)


def tcn_block_kernel(x_ref, w1_ref, b1_ref, w2_ref, b2_ref, wd_ref, bd_ref,
                     out_ref, *, K, dil, pad, bB):
    # x_ref : (bB, Cin_p, L)            -- channels on sublanes, L on lanes
    # w1_ref: (Cout_p, K*Cin_p)   b1_ref: (Cout_p, 1)
    # w2_ref: (Cout_p, K*Cout_p)  b2_ref: (Cout_p, 1)
    # wd_ref: (Cout_p, Cin_p)     bd_ref: (Cout_p, 1)
    for b in range(bB):                                   # static unroll
        x = x_ref[b]                                      # (Cin_p, L)

        # residual path: 1x1 conv == plain (Cout, Cin) @ (Cin, L), aligned read
        res = jnp.dot(wd_ref[...], x,
                      preferred_element_type=jnp.float32) + bd_ref[...]

        # conv1: single im2col matmul over all K taps, then bias + ReLU
        slab1 = _im2col(x, K, dil, pad)                   # (K*Cin_p, L)
        h1 = jnp.dot(w1_ref[...], slab1,
                     preferred_element_type=jnp.float32) + b1_ref[...]
        h1 = jnp.maximum(h1, 0.0)
        # TODO(synk): training-mode dropout not implemented (eval-mode identity).

        # conv2: same structure on the ReLU'd activations
        slab2 = _im2col(h1.astype(w2_ref.dtype), K, dil, pad)   # (K*Cout_p, L)
        h2 = jnp.dot(w2_ref[...], slab2,
                     preferred_element_type=jnp.float32) + b2_ref[...]
        h2 = jnp.maximum(h2, 0.0)

        # fused epilogue: final ReLU(out + residual) straight into the out tile
        out_ref[b] = jnp.maximum(h2 + res, 0.0).astype(out_ref.dtype)


def tcn_block(x_ncl, w1, b1, w2, b2, wd=None, bd=None, *, kernel_size=3,
              dilation=1, batch_block=None, mxu_dtype=None):
    """TCNBlock forward.

    x_ncl: (B, Cin, L) float32 -- PyTorch NCL layout (kept as-is, no transpose).
    w1: (Cout, Cin, K), b1: (Cout,)   -- nn.Conv1d parameter layout.
    w2: (Cout, Cout, K), b2: (Cout,)
    wd: (Cout, Cin) or None (identity residual when in_channels==out_channels),
    bd: (Cout,) or None.
    Returns (B, Cout, L) float32.
    """
    B, Cin, L = x_ncl.shape
    Cout = w1.shape[0]
    K, dil = kernel_size, dilation
    pad = (K - 1) * dil // 2
    # Only the "same-length" TCN configuration of the module is expressible.
    assert 2 * pad == (K - 1) * dil
    assert pad < L

    # Round channel counts up to sublane multiples (8) for tile alignment.
    Cin_p = _round_up(Cin, 8)
    Cout_p = _round_up(Cout, 8)

    cdt = mxu_dtype or jnp.float32

    x_p = x_ncl.astype(cdt)
    if Cin_p != Cin:
        x_p = jnp.pad(x_p, ((0, 0), (0, Cin_p - Cin), (0, 0)))

    def _flatten_conv_w(w, cin, cin_p):
        # (Cout, cin, K) -> (Cout_p, K*cin_p), flat index = k*cin_p + c.
        cout = w.shape[0]
        w = jnp.transpose(w, (0, 2, 1))                    # (Cout, K, cin)
        w = jnp.pad(w, ((0, Cout_p - cout), (0, 0), (0, cin_p - cin)))
        return w.reshape(Cout_p, K * cin_p).astype(cdt)

    def _pad_bias(b):
        return jnp.pad(b.reshape(-1, 1),
                       ((0, Cout_p - b.shape[0]), (0, 0))).astype(jnp.float32)

    w1_f = _flatten_conv_w(w1, Cin, Cin_p)
    w2_f = _flatten_conv_w(w2, Cout, Cout_p)
    b1_f = _pad_bias(b1)
    b2_f = _pad_bias(b2)

    if wd is None:                       # module: downsample only if Cin != Cout
        wd = jnp.eye(Cout, Cin, dtype=jnp.float32)
        bd = jnp.zeros((Cout,), jnp.float32)
    wd_f = jnp.pad(wd, ((0, Cout_p - Cout), (0, Cin_p - Cin))).astype(cdt)
    bd_f = _pad_bias(bd)

    # Pack a few batch rows per grid step (amortize per-step overhead when B is
    # small); the grid axis stays "parallel" for multi-TensorCore sharding.
    if batch_block is None:
        batch_block = next(bb for bb in (4, 2, 1) if B % bb == 0)
    assert B % batch_block == 0
    bB = batch_block

    kernel = functools.partial(tcn_block_kernel, K=K, dil=dil, pad=pad, bB=bB)

    out_p = pl.pallas_call(
        kernel,
        out_shape=jax.ShapeDtypeStruct((B, Cout_p, L), jnp.float32),
        grid_spec=pltpu.PrefetchScalarGridSpec(
            num_scalar_prefetch=0,
            grid=(B // bB,),
            in_specs=[
                pl.BlockSpec((bB, Cin_p, L), lambda b: (b, 0, 0)),
                pl.BlockSpec((Cout_p, K * Cin_p), lambda b: (0, 0)),
                pl.BlockSpec((Cout_p, 1), lambda b: (0, 0)),
                pl.BlockSpec((Cout_p, K * Cout_p), lambda b: (0, 0)),
                pl.BlockSpec((Cout_p, 1), lambda b: (0, 0)),
                pl.BlockSpec((Cout_p, Cin_p), lambda b: (0, 0)),
                pl.BlockSpec((Cout_p, 1), lambda b: (0, 0)),
            ],
            out_specs=pl.BlockSpec((bB, Cout_p, L), lambda b: (b, 0, 0)),
        ),
        compiler_params=pltpu.CompilerParams(
            dimension_semantics=("parallel",)),
    )(x_p, w1_f, b1_f, w2_f, b2_f, wd_f, bd_f)

    return out_p[:, :Cout, :] if Cout_p != Cout else out_p


# ------------------------- pure-JAX reference ------------------------------
def tcn_block_ref(x_ncl, w1, b1, w2, b2, wd=None, bd=None, *, kernel_size=3,
                  dilation=1):
    pad = (kernel_size - 1) * dilation // 2

    def conv(x, w, b):
        out = jax.lax.conv_general_dilated(
            x, w, window_strides=(1,), padding=[(pad, pad)],
            rhs_dilation=(dilation,),
            dimension_numbers=("NCW", "OIW", "NCW"))
        return out + b[None, :, None]

    if wd is None:
        res = x_ncl
    else:
        res = jnp.einsum("oc,bcl->bol", wd, x_ncl) + bd[None, :, None]
    h = jax.nn.relu(conv(x_ncl, w1, b1))
    h = jax.nn.relu(conv(h, w2, b2))
    return jax.nn.relu(h + res)


if __name__ == "__main__":
    B, Cin, Cout, L, K, DIL = 2, 4, 8, 16, 3, 1

    key = jax.random.PRNGKey(0)
    k_x, k_w1, k_b1, k_w2, k_b2, k_wd, k_bd = jax.random.split(key, 7)

    x = jax.random.normal(k_x, (B, Cin, L), jnp.float32)          # NCL, like PyTorch
    # Parameters in PyTorch nn.Conv1d layout: weight (Cout, Cin, K), bias (Cout,)
    w1 = 0.1 * jax.random.normal(k_w1, (Cout, Cin, K), jnp.float32)
    b1 = 0.1 * jax.random.normal(k_b1, (Cout,), jnp.float32)
    w2 = 0.1 * jax.random.normal(k_w2, (Cout, Cout, K), jnp.float32)
    b2 = 0.1 * jax.random.normal(k_b2, (Cout,), jnp.float32)
    # downsample 1x1 conv (present because Cin != Cout)
    wd = 0.1 * jax.random.normal(k_wd, (Cout, Cin), jnp.float32)
    bd = 0.1 * jax.random.normal(k_bd, (Cout,), jnp.float32)

    out = tcn_block(x, w1, b1, w2, b2, wd, bd, kernel_size=K, dilation=DIL)
    out = jax.block_until_ready(out)

    ref = tcn_block_ref(x, w1, b1, w2, b2, wd, bd, kernel_size=K, dilation=DIL)
    assert out.shape == (B, Cout, L)
    assert jnp.allclose(out, ref, atol=1e-5, rtol=1e-5), "mismatch vs reference"

    print("KERNEL_OK")
</pallas_src>

<mosaic_0001>
module attributes {stable_mosaic.version = 11 : i64} {
  func.func @tcn_block_kernel(%arg0: i32, %arg1: memref<2x8x16xf32, #tpu.memory_space<vmem>>, %arg2: memref<8x24xf32, #tpu.memory_space<vmem>>, %arg3: memref<8x1xf32, #tpu.memory_space<vmem>>, %arg4: memref<8x24xf32, #tpu.memory_space<vmem>>, %arg5: memref<8x1xf32, #tpu.memory_space<vmem>>, %arg6: memref<8x8xf32, #tpu.memory_space<vmem>>, %arg7: memref<8x1xf32, #tpu.memory_space<vmem>>, %arg8: memref<2x8x16xf32, #tpu.memory_space<vmem>>) attributes {dimension_semantics = [#tpu.dimension_semantics<parallel>], iteration_bounds = array<i64: 1>, scalar_prefetch = 0 : i64, scratch_operands = 0 : i64, tpu.core_type = #tpu.core_type<tc>, window_params = [{transform_indices = @transform_0, window_bounds = array<i64: 2, 8, 16>}, {pipeline_mode = #tpu.pipeline_mode<synchronous>, transform_indices = @transform_1, window_bounds = array<i64: 8, 24>}, {pipeline_mode = #tpu.pipeline_mode<synchronous>, transform_indices = @transform_2, window_bounds = array<i64: 8, 1>}, {pipeline_mode = #tpu.pipeline_mode<synchronous>, transform_indices = @transform_3, window_bounds = array<i64: 8, 24>}, {pipeline_mode = #tpu.pipeline_mode<synchronous>, transform_indices = @transform_4, window_bounds = array<i64: 8, 1>}, {pipeline_mode = #tpu.pipeline_mode<synchronous>, transform_indices = @transform_5, window_bounds = array<i64: 8, 8>}, {pipeline_mode = #tpu.pipeline_mode<synchronous>, transform_indices = @transform_6, window_bounds = array<i64: 8, 1>}, {transform_indices = @transform_7, window_bounds = array<i64: 2, 8, 16>}]} {
    %c0 = arith.constant 0 : index
    %c0_0 = arith.constant 0 : index
    %c0_1 = arith.constant 0 : index
    %0 = vector.load %arg1[%c0, %c0_0, %c0_1] : memref<2x8x16xf32, #tpu.memory_space<vmem>>, vector<1x8x16xf32>
    %1 = vector.shape_cast %0 : vector<1x8x16xf32> to vector<8x16xf32>
    %c0_2 = arith.constant 0 : index
    %c0_3 = arith.constant 0 : index
    %2 = vector.load %arg6[%c0_2, %c0_3] : memref<8x8xf32, #tpu.memory_space<vmem>>, vector<8x8xf32>
    %cst = arith.constant dense<0.000000e+00> : vector<8x16xf32>
    %3 = tpu.matmul %2, %1, %cst {dimension_numbers = #tpu.dot_dimension_numbers<[1], [0], [0], [1], [0, 0, 1, 1], [], []>} : vector<8x8xf32>, vector<8x16xf32>, vector<8x16xf32> -> vector<8x16xf32>
    %c0_4 = arith.constant 0 : index
    %c0_5 = arith.constant 0 : index
    %4 = vector.load %arg7[%c0_4, %c0_5] : memref<8x1xf32, #tpu.memory_space<vmem>>, vector<8x1xf32>
    %5 = vector.broadcast %4 : vector<8x1xf32> to vector<8x16xf32>
    %6 = arith.addf %3, %5 : vector<8x16xf32>
    %cst_6 = arith.constant 0.000000e+00 : f32
    %7 = vector.broadcast %cst_6 : f32 to vector<8x1xf32>
    %8 = vector.extract_strided_slice %1 {offsets = [0, 0], sizes = [8, 15], strides = [1, 1]} : vector<8x16xf32> to vector<8x15xf32>
    %9 = tpu.concatenate %7, %8 in 1 : vector<8x1xf32>, vector<8x15xf32> -> vector<8x16xf32>
    %cst_7 = arith.constant 0.000000e+00 : f32
    %10 = vector.broadcast %cst_7 : f32 to vector<8x1xf32>
    %11 = vector.extract_strided_slice %1 {offsets = [0, 1], sizes = [8, 15], strides = [1, 1]} : vector<8x16xf32> to vector<8x15xf32>
    %12 = tpu.concatenate %11, %10 in 1 : vector<8x15xf32>, vector<8x1xf32> -> vector<8x16xf32>
    %13 = tpu.concatenate %9, %1, %12 in 0 : vector<8x16xf32>, vector<8x16xf32>, vector<8x16xf32> -> vector<24x16xf32>
    %c0_8 = arith.constant 0 : index
    %c0_9 = arith.constant 0 : index
    %14 = vector.load %arg2[%c0_8, %c0_9] : memref<8x24xf32, #tpu.memory_space<vmem>>, vector<8x24xf32>
    %cst_10 = arith.constant dense<0.000000e+00> : vector<8x16xf32>
    %15 = tpu.matmul %14, %13, %cst_10 {dimension_numbers = #tpu.dot_dimension_numbers<[1], [0], [0], [1], [0, 0, 1, 1], [], []>} : vector<8x24xf32>, vector<24x16xf32>, vector<8x16xf32> -> vector<8x16xf32>
    %c0_11 = arith.constant 0 : index
    %c0_12 = arith.constant 0 : index
    %16 = vector.load %arg3[%c0_11, %c0_12] : memref<8x1xf32, #tpu.memory_space<vmem>>, vector<8x1xf32>
    %17 = vector.broadcast %16 : vector<8x1xf32> to vector<8x16xf32>
    %18 = arith.addf %15, %17 : vector<8x16xf32>
    %cst_13 = arith.constant 0.000000e+00 : f32
    %19 = vector.broadcast %cst_13 : f32 to vector<8x16xf32>
    %20 = arith.maximumf %18, %19 : vector<8x16xf32>
    %cst_14 = arith.constant 0.000000e+00 : f32
    %21 = vector.broadcast %cst_14 : f32 to vector<8x1xf32>
    %22 = vector.extract_strided_slice %20 {offsets = [0, 0], sizes = [8, 15], strides = [1, 1]} : vector<8x16xf32> to vector<8x15xf32>
    %23 = tpu.concatenate %21, %22 in 1 : vector<8x1xf32>, vector<8x15xf32> -> vector<8x16xf32>
    %cst_15 = arith.constant 0.000000e+00 : f32
    %24 = vector.broadcast %cst_15 : f32 to vector<8x1xf32>
    %25 = vector.extract_strided_slice %20 {offsets = [0, 1], sizes = [8, 15], strides = [1, 1]} : vector<8x16xf32> to vector<8x15xf32>
    %26 = tpu.concatenate %25, %24 in 1 : vector<8x15xf32>, vector<8x1xf32> -> vector<8x16xf32>
    %27 = tpu.concatenate %23, %20, %26 in 0 : vector<8x16xf32>, vector<8x16xf32>, vector<8x16xf32> -> vector<24x16xf32>
    %c0_16 = arith.constant 0 : index
    %c0_17 = arith.constant 0 : index
    %28 = vector.load %arg4[%c0_16, %c0_17] : memref<8x24xf32, #tpu.memory_space<vmem>>, vector<8x24xf32>
    %cst_18 = arith.constant dense<0.000000e+00> : vector<8x16xf32>
    %29 = tpu.matmul %28, %27, %cst_18 {dimension_numbers = #tpu.dot_dimension_numbers<[1], [0], [0], [1], [0, 0, 1, 1], [], []>} : vector<8x24xf32>, vector<24x16xf32>, vector<8x16xf32> -> vector<8x16xf32>
    %c0_19 = arith.constant 0 : index
    %c0_20 = arith.constant 0 : index
    %30 = vector.load %arg5[%c0_19, %c0_20] : memref<8x1xf32, #tpu.memory_space<vmem>>, vector<8x1xf32>
    %31 = vector.broadcast %30 : vector<8x1xf32> to vector<8x16xf32>
    %32 = arith.addf %29, %31 : vector<8x16xf32>
    %cst_21 = arith.constant 0.000000e+00 : f32
    %33 = vector.broadcast %cst_21 : f32 to vector<8x16xf32>
    %34 = arith.maximumf %32, %33 : vector<8x16xf32>
    %35 = arith.addf %34, %6 : vector<8x16xf32>
    %cst_22 = arith.constant 0.000000e+00 : f32
    %36 = vector.broadcast %cst_22 : f32 to vector<8x16xf32>
    %37 = arith.maximumf %35, %36 : vector<8x16xf32>
    %c0_23 = arith.constant 0 : index
    %c0_24 = arith.constant 0 : index
    %c0_25 = arith.constant 0 : index
    %38 = vector.load %arg8[%c0_23, %c0_24, %c0_25] : memref<2x8x16xf32, #tpu.memory_space<vmem>>, vector<1x8x16xf32>
    %39 = vector.shape_cast %38 : vector<1x8x16xf32> to vector<8x16xf32>
    %40 = vector.shape_cast %37 : vector<8x16xf32> to vector<1x8x16xf32>
    tpu.vector_store %arg8[%c0_23, %c0_24, %c0_25], %40 {strides = array<i32>} : memref<2x8x16xf32, #tpu.memory_space<vmem>>, vector<1x8x16xf32>,
    %c1 = arith.constant 1 : index
    %c0_26 = arith.constant 0 : index
    %c0_27 = arith.constant 0 : index
    %41 = vector.load %arg1[%c1, %c0_26, %c0_27] : memref<2x8x16xf32, #tpu.memory_space<vmem>>, vector<1x8x16xf32>
    %42 = vector.shape_cast %41 : vector<1x8x16xf32> to vector<8x16xf32>
    %c0_28 = arith.constant 0 : index
    %c0_29 = arith.constant 0 : index
    %43 = vector.load %arg6[%c0_28, %c0_29] : memref<8x8xf32, #tpu.memory_space<vmem>>, vector<8x8xf32>
    %cst_30 = arith.constant dense<0.000000e+00> : vector<8x16xf32>
    %44 = tpu.matmul %43, %42, %cst_30 {dimension_numbers = #tpu.dot_dimension_numbers<[1], [0], [0], [1], [0, 0, 1, 1], [], []>} : vector<8x8xf32>, vector<8x16xf32>, vector<8x16xf32> -> vector<8x16xf32>
    %c0_31 = arith.constant 0 : index
    %c0_32 = arith.constant 0 : index
    %45 = vector.load %arg7[%c0_31, %c0_32] : memref<8x1xf32, #tpu.memory_space<vmem>>, vector<8x1xf32>
    %46 = vector.broadcast %45 : vector<8x1xf32> to vector<8x16xf32>
    %47 = arith.addf %44, %46 : vector<8x16xf32>
    %cst_33 = arith.constant 0.000000e+00 : f32
    %48 = vector.broadcast %cst_33 : f32 to vector<8x1xf32>
    %49 = vector.extract_strided_slice %42 {offsets = [0, 0], sizes = [8, 15], strides = [1, 1]} : vector<8x16xf32> to vector<8x15xf32>
    %50 = tpu.concatenate %48, %49 in 1 : vector<8x1xf32>, vector<8x15xf32> -> vector<8x16xf32>
    %cst_34 = arith.constant 0.000000e+00 : f32
    %51 = vector.broadcast %cst_34 : f32 to vector<8x1xf32>
    %52 = vector.extract_strided_slice %42 {offsets = [0, 1], sizes = [8, 15], strides = [1, 1]} : vector<8x16xf32> to vector<8x15xf32>
    %53 = tpu.concatenate %52, %51 in 1 : vector<8x15xf32>, vector<8x1xf32> -> vector<8x16xf32>
    %54 = tpu.concatenate %50, %42, %53 in 0 : vector<8x16xf32>, vector<8x16xf32>, vector<8x16xf32> -> vector<24x16xf32>
    %c0_35 = arith.constant 0 : index
    %c0_36 = arith.constant 0 : index
    %55 = vector.load %arg2[%c0_35, %c0_36] : memref<8x24xf32, #tpu.memory_space<vmem>>, vector<8x24xf32>
    %cst_37 = arith.constant dense<0.000000e+00> : vector<8x16xf32>
    %56 = tpu.matmul %55, %54, %cst_37 {dimension_numbers = #tpu.dot_dimension_numbers<[1], [0], [0], [1], [0, 0, 1, 1], [], []>} : vector<8x24xf32>, vector<24x16xf32>, vector<8x16xf32> -> vector<8x16xf32>
    %c0_38 = arith.constant 0 : index
    %c0_39 = arith.constant 0 : index
    %57 = vector.load %arg3[%c0_38, %c0_39] : memref<8x1xf32, #tpu.memory_space<vmem>>, vector<8x1xf32>
    %58 = vector.broadcast %57 : vector<8x1xf32> to vector<8x16xf32>
    %59 = arith.addf %56, %58 : vector<8x16xf32>
    %cst_40 = arith.constant 0.000000e+00 : f32
    %60 = vector.broadcast %cst_40 : f32 to vector<8x16xf32>
    %61 = arith.maximumf %59, %60 : vector<8x16xf32>
    %cst_41 = arith.constant 0.000000e+00 : f32
    %62 = vector.broadcast %cst_41 : f32 to vector<8x1xf32>
    %63 = vector.extract_strided_slice %61 {offsets = [0, 0], sizes = [8, 15], strides = [1, 1]} : vector<8x16xf32> to vector<8x15xf32>
    %64 = tpu.concatenate %62, %63 in 1 : vector<8x1xf32>, vector<8x15xf32> -> vector<8x16xf32>
    %cst_42 = arith.constant 0.000000e+00 : f32
    %65 = vector.broadcast %cst_42 : f32 to vector<8x1xf32>
    %66 = vector.extract_strided_slice %61 {offsets = [0, 1], sizes = [8, 15], strides = [1, 1]} : vector<8x16xf32> to vector<8x15xf32>
    %67 = tpu.concatenate %66, %65 in 1 : vector<8x15xf32>, vector<8x1xf32> -> vector<8x16xf32>
    %68 = tpu.concatenate %64, %61, %67 in 0 : vector<8x16xf32>, vector<8x16xf32>, vector<8x16xf32> -> vector<24x16xf32>
    %c0_43 = arith.constant 0 : index
    %c0_44 = arith.constant 0 : index
    %69 = vector.load %arg4[%c0_43, %c0_44] : memref<8x24xf32, #tpu.memory_space<vmem>>, vector<8x24xf32>
    %cst_45 = arith.constant dense<0.000000e+00> : vector<8x16xf32>
    %70 = tpu.matmul %69, %68, %cst_45 {dimension_numbers = #tpu.dot_dimension_numbers<[1], [0], [0], [1], [0, 0, 1, 1], [], []>} : vector<8x24xf32>, vector<24x16xf32>, vector<8x16xf32> -> vector<8x16xf32>
    %c0_46 = arith.constant 0 : index
    %c0_47 = arith.constant 0 : index
    %71 = vector.load %arg5[%c0_46, %c0_47] : memref<8x1xf32, #tpu.memory_space<vmem>>, vector<8x1xf32>
    %72 = vector.broadcast %71 : vector<8x1xf32> to vector<8x16xf32>
    %73 = arith.addf %70, %72 : vector<8x16xf32>
    %cst_48 = arith.constant 0.000000e+00 : f32
    %74 = vector.broadcast %cst_48 : f32 to vector<8x16xf32>
    %75 = arith.maximumf %73, %74 : vector<8x16xf32>
    %76 = arith.addf %75, %47 : vector<8x16xf32>
    %cst_49 = arith.constant 0.000000e+00 : f32
    %77 = vector.broadcast %cst_49 : f32 to vector<8x16xf32>
    %78 = arith.maximumf %76, %77 : vector<8x16xf32>
    %c1_50 = arith.constant 1 : index
    %c0_51 = arith.constant 0 : index
    %c0_52 = arith.constant 0 : index
    %79 = vector.load %arg8[%c1_50, %c0_51, %c0_52] : memref<2x8x16xf32, #tpu.memory_space<vmem>>, vector<1x8x16xf32>
    %80 = vector.shape_cast %79 : vector<1x8x16xf32> to vector<8x16xf32>
    %81 = vector.shape_cast %78 : vector<8x16xf32> to vector<1x8x16xf32>
    tpu.vector_store %arg8[%c1_50, %c0_51, %c0_52], %81 {strides = array<i32>} : memref<2x8x16xf32, #tpu.memory_space<vmem>>, vector<1x8x16xf32>,
    return
  }
  func.func @transform_0(%arg0: i32) -> (i32, i32, i32) {
    %c0_i32 = arith.constant 0 : i32
    %c0_i32_0 = arith.constant 0 : i32
    %c0_i32_1 = arith.constant 0 : i32
    return %arg0, %c0_i32, %c0_i32_0 : i32, i32, i32
  }
  func.func @transform_1(%arg0: i32) -> (i32, i32) {
    %c0_i32 = arith.constant 0 : i32
    %c0_i32_0 = arith.constant 0 : i32
    %c0_i32_1 = arith.constant 0 : i32
    return %c0_i32, %c0_i32_0 : i32, i32
  }
  func.func @transform_2(%arg0: i32) -> (i32, i32) {
    %c0_i32 = arith.constant 0 : i32
    %c0_i32_0 = arith.constant 0 : i32
    %c0_i32_1 = arith.constant 0 : i32
    return %c0_i32, %c0_i32_0 : i32, i32
  }
  func.func @transform_3(%arg0: i32) -> (i32, i32) {
    %c0_i32 = arith.constant 0 : i32
    %c0_i32_0 = arith.constant 0 : i32
    %c0_i32_1 = arith.constant 0 : i32
    return %c0_i32, %c0_i32_0 : i32, i32
  }
  func.func @transform_4(%arg0: i32) -> (i32, i32) {
    %c0_i32 = arith.constant 0 : i32
    %c0_i32_0 = arith.constant 0 : i32
    %c0_i32_1 = arith.constant 0 : i32
    return %c0_i32, %c0_i32_0 : i32, i32
  }
  func.func @transform_5(%arg0: i32) -> (i32, i32) {
    %c0_i32 = arith.constant 0 : i32
    %c0_i32_0 = arith.constant 0 : i32
    %c0_i32_1 = arith.constant 0 : i32
    return %c0_i32, %c0_i32_0 : i32, i32
  }
  func.func @transform_6(%arg0: i32) -> (i32, i32) {
    %c0_i32 = arith.constant 0 : i32
    %c0_i32_0 = arith.constant 0 : i32
    %c0_i32_1 = arith.constant 0 : i32
    return %c0_i32, %c0_i32_0 : i32, i32
  }
  func.func @transform_7(%arg0: i32) -> (i32, i32, i32) {
    %c0_i32 = arith.constant 0 : i32
    %c0_i32_0 = arith.constant 0 : i32
    %c0_i32_1 = arith.constant 0 : i32
    return %arg0, %c0_i32, %c0_i32_0 : i32, i32, i32
  }
}

</mosaic_0001>

<llo_original>
// kernel: tpu_custom_call.1
$region0: #{tpu_custom_call.1}
  #allocation0 [shape = 'u32[]', space=smem, size = 0x4, offset = 0x4, fixed_abs, tag = 'smem constant byte address 0x4 - core index']
  #allocation1 [shape = 'u32[72,128]{1,0:T(1,128)}', space=vmem, size = 0x9000, scoped, tag = 'internal scratch']
  %s0 = inlined_call_operand.vmem [shape: f32[2,8,16], index: 0, kind: input, shape index: {}]
  %s1 = inlined_call_operand.vmem [shape: f32[8,24], index: 1, kind: input, shape index: {}]
  %s2 = inlined_call_operand.vmem [shape: f32[8,1], index: 2, kind: input, shape index: {}]
  %s3 = inlined_call_operand.hbm [shape: f32[8,24], index: 3, kind: input, shape index: {}]
  %s4 = inlined_call_operand.vmem [shape: f32[8,1], index: 4, kind: input, shape index: {}]
  %s5 = inlined_call_operand.hbm [shape: f32[8,8], index: 5, kind: input, shape index: {}]
  %s6 = inlined_call_operand.vmem [shape: f32[8,1], index: 6, kind: input, shape index: {}]
  %s7 = inlined_call_operand.hbm [shape: f32[2,8,16], index: 7, kind: output, shape index: {}]
  %s8 = sld [smem:[#allocation0]]
  $region46: #{tpu_custom_call.1} parent=0
    _
  %s10 = ssub.s32 1, %s8
  %s11 = scalar_select 0, %s10, %s8
  $region1: #{tpu_custom_call.1} parent=0
    #allocation2 [shape = 'u8[4096]{0}', space=vmem, size = 0x1000, scoped, tag = 'input window, operand 3, single buffered']
    #allocation3 [shape = 's32[1]{0}', space=sflag, size = 0x4, scoped, tag = 'scoped memory for tpu_custom_call.1']
    #allocation4 [shape = 's32[1]{0}', space=sflag, size = 0x4, scoped, tag = 'scoped memory for tpu_custom_call.1']
    #allocation5 [shape = 'u8[4096]{0}', space=vmem, size = 0x1000, scoped, tag = 'input window, operand 5, single buffered']
    #allocation6 [shape = 's32[1]{0}', space=sflag, size = 0x4, scoped, tag = 'scoped memory for tpu_custom_call.1']
    #allocation7 [shape = 'u8[8192]{0}', space=vmem, size = 0x2000, scoped, tag = 'output window, operand 0, single buffered']
    %12 = vsyncpa [#allocation3], 0
    %13 = vsyncpa [#allocation6], 0
    %14 = vsyncpa [#allocation4], 0
    // Predicated region
    $region2: #{tpu_custom_call.1} parent=1 // pred_check
      _
    $region3: #{tpu_custom_call.1} parent=1 // pred_check_branch
      %16 = sbr.rel (0) target = $region5
    $region4: #{tpu_custom_call.1} parent=1 // pred_region
      _
    $region5: #{tpu_custom_call.1} parent=1 // pred_fallthru
      _
    // Predicated region
    $region6: #{tpu_custom_call.1} parent=1 // pred_check
      _
    $region7: #{tpu_custom_call.1} parent=1 // pred_check_branch
      %18 = sbr.rel (0) target = $region9
    $region8: #{tpu_custom_call.1} parent=1 // pred_region
      _
    $region9: #{tpu_custom_call.1} parent=1 // pred_fallthru
      _
    // Predicated region
    $region10: #{tpu_custom_call.1} parent=1 // pred_check
      _
    $region11: #{tpu_custom_call.1} parent=1 // pred_check_branch
      %20 = sbr.rel (0) target = $region13
    $region12: #{tpu_custom_call.1} parent=1 // pred_region
      _
    $region13: #{tpu_custom_call.1} parent=1 // pred_fallthru
      _
    // Predicated region
    $region14: #{tpu_custom_call.1} parent=1 // pred_check
      _
    $region15: #{tpu_custom_call.1} parent=1 // pred_check_branch
      %22 = sbr.rel (0) target = $region17
    $region16: #{tpu_custom_call.1} parent=1 // pred_region
      %24 = vsyncadd [#allocation3], 0
      %s26 = sshll.u32 %s3, 4
      %s27 = int_to_ptr.hbm [resolvable:$true] %s26
      %s28 = sshll.u32 [#allocation2], 4
      %s29 = int_to_ptr.vmem [resolvable:$true] %s28
      %31 = dma.hbm_to_vmem [thread:$0]  %s27, 128, %s29, [#allocation3]
    $region17: #{tpu_custom_call.1} parent=1 // pred_fallthru
      _
    // Predicated region
    $region18: #{tpu_custom_call.1} parent=1 // pred_check
      _
    $region19: #{tpu_custom_call.1} parent=1 // pred_check_branch
      %33 = sbr.rel (0) target = $region21
    $region20: #{tpu_custom_call.1} parent=1 // pred_region
      _
    $region21: #{tpu_custom_call.1} parent=1 // pred_fallthru
      _
    // Predicated region
    $region22: #{tpu_custom_call.1} parent=1 // pred_check
      _
    $region23: #{tpu_custom_call.1} parent=1 // pred_check_branch
      %35 = sbr.rel (0) target = $region25
    $region24: #{tpu_custom_call.1} parent=1 // pred_region
      %37 = vsyncadd [#allocation6], 0
      %s39 = sshll.u32 %s5, 4
      %s40 = int_to_ptr.hbm [resolvable:$true] %s39
      %s41 = sshll.u32 [#allocation5], 4
      %s42 = int_to_ptr.vmem [resolvable:$true] %s41
      %44 = dma.hbm_to_vmem [thread:$0]  %s40, 128, %s42, [#allocation6]
    $region25: #{tpu_custom_call.1} parent=1 // pred_fallthru
      _
    // Predicated region
    $region26: #{tpu_custom_call.1} parent=1 // pred_check
      _
    $region27: #{tpu_custom_call.1} parent=1 // pred_check_branch
      %46 = sbr.rel (0) target = $region29
    $region28: #{tpu_custom_call.1} parent=1 // pred_region
      _
    $region29: #{tpu_custom_call.1} parent=1 // pred_fallthru
      _
    // Predicated region
    $region30: #{tpu_custom_call.1} parent=1 // pred_check
      _
    $region31: #{tpu_custom_call.1} parent=1 // pred_check_branch
      %48 = sbr.rel (0) target = $region33
    $region32: #{tpu_custom_call.1} parent=1 // pred_region
      %50 = dma.done [#allocation3], 128
    $region33: #{tpu_custom_call.1} parent=1 // pred_fallthru
      _
    // Predicated region
    $region34: #{tpu_custom_call.1} parent=1 // pred_check
      _
    $region35: #{tpu_custom_call.1} parent=1 // pred_check_branch
      %52 = sbr.rel (0) target = $region37
    $region36: #{tpu_custom_call.1} parent=1 // pred_region
      %54 = dma.done [#allocation6], 128
    $region37: #{tpu_custom_call.1} parent=1 // pred_fallthru
      _
    %v55 = vld [vmem:[%s0] sm:$0xff]
    %v56 = vld [vmem:[#allocation5] sm:$0xff]
    %v57 = vld [vmem:[%s6] sm:$0xff]
    %59 = vset.pattern.permute.xlu0 0
    %60 = vperm.xlu0 %59, %v57
    %v61 = vpop.permute.xlu0 %60
    %vm63 = vcmask 64512
    %v65 = vsel %vm63, %v56, 0
    %67 = vmatpush.msra.mxu0 0.0
    %68 = vmatpush.msra.mxu0 0.0
    %69 = vmatpush.msra.mxu0 0.0
    %70 = vmatpush.msra.mxu0 0.0
    %71 = vmatpush.msra.mxu0 0.0
    %72 = vmatpush.msra.mxu0 0.0
    %73 = vmatpush.msra.mxu0 0.0
    %74 = vmatpush.msra.mxu0 0.0
    %75 = vmatpush.msra.mxu0 0.0
    %76 = vmatpush.msra.mxu0 0.0
    %77 = vmatpush.msra.mxu0 0.0
    %78 = vmatpush.msra.mxu0 0.0
    %79 = vmatpush.msra.mxu0 0.0
    %80 = vmatpush.msra.mxu0 0.0
    %81 = vmatpush.msra.mxu0 0.0
    %82 = vmatpush.msra.mxu0 %v55
    %83 = vmatmul.f32.gmra.mxu0 %v65
    %v84 = vpop.f32.mrf.mxu0
    %v85 = vadd.f32 %v61, %v84
    %86 = vdwg.mxu0
    %88 = vrot.lane.b32.xlu0 %v55, 1
    %v89 = vpop.permute.xlu0 %88
    %vm91 = vcmask 7168
    %v92 = vsel %vm91, 0.0, %v89
    %93 = vrot.lane.b32.xlu0 %v55, 127
    %v94 = vpop.permute.xlu0 %93
    %vm96 = vcmask 121856
    %v97 = vsel %vm96, %v94, 0.0
    %v98 = vld [vmem:[%s1] sm:$0xff]
    %v99 = vld [vmem:[%s2] sm:$0xff]
    %101 = vset.pattern.permute.xlu0 0
    %102 = vperm.xlu0 %101, %v99
    %v103 = vpop.permute.xlu0 %102
    %vm105 = vcmask 195584
    %v107 = vsel %vm105, %v98, 0
    %109 = vmatpush.msra.mxu0 0.0
    %110 = vmatpush.msra.mxu0 0.0
    %111 = vmatpush.msra.mxu0 0.0
    %112 = vmatpush.msra.mxu0 0.0
    %113 = vmatpush.msra.mxu0 0.0
    %114 = vmatpush.msra.mxu0 0.0
    %115 = vmatpush.msra.mxu0 0.0
    %116 = vmatpush.msra.mxu0 0.0
    %117 = vmatpush.msra.mxu0 0.0
    %118 = vmatpush.msra.mxu0 0.0
    %119 = vmatpush.msra.mxu0 0.0
    %120 = vmatpush.msra.mxu0 0.0
    %121 = vmatpush.msra.mxu0 0.0
    %122 = vmatpush.msra.mxu0 %v97
    %123 = vmatpush.msra.mxu0 %v55
    %124 = vmatpush.msra.mxu0 %v92
    %125 = vmatmul.f32.gmra.mxu0 %v107
    %v126 = vpop.f32.mrf.mxu0
    %v127 = vadd.f32 %v103, %v126
    %128 = vdwg.mxu0
    %v129 = vmax.f32 %v127, 0.0
    %131 = vrot.lane.b32.xlu0 %v129, 1
    %v132 = vpop.permute.xlu0 %131
    %v134 = vsel %vm91, 0.0, %v132
    %135 = vrot.lane.b32.xlu0 %v129, 127
    %v136 = vpop.permute.xlu0 %135
    %v138 = vsel %vm96, %v136, 0.0
    %v139 = vld [vmem:[#allocation2] sm:$0xff]
    %v140 = vld [vmem:[%s4] sm:$0xff]
    %142 = vset.pattern.permute.xlu0 0
    %143 = vperm.xlu0 %142, %v140
    %v144 = vpop.permute.xlu0 %143
    %v147 = vsel %vm105, %v139, 0
    %149 = vmatpush.msra.mxu0 0.0
    %150 = vmatpush.msra.mxu0 0.0
    %151 = vmatpush.msra.mxu0 0.0
    %152 = vmatpush.msra.mxu0 0.0
    %153 = vmatpush.msra.mxu0 0.0
    %154 = vmatpush.msra.mxu0 0.0
    %155 = vmatpush.msra.mxu0 0.0
    %156 = vmatpush.msra.mxu0 0.0
    %157 = vmatpush.msra.mxu0 0.0
    %158 = vmatpush.msra.mxu0 0.0
    %159 = vmatpush.msra.mxu0 0.0
    %160 = vmatpush.msra.mxu0 0.0
    %161 = vmatpush.msra.mxu0 0.0
    %162 = vmatpush.msra.mxu0 %v138
    %163 = vmatpush.msra.mxu0 %v129
    %164 = vmatpush.msra.mxu0 %v134
    %165 = vmatmul.f32.gmra.mxu0 %v147
    %v166 = vpop.f32.mrf.mxu0
    %v167 = vadd.f32 %v144, %v166
    %168 = vdwg.mxu0
    %v169 = vmax.f32 %v167, 0.0
    %v170 = vadd.f32 %v169, %v85
    %v171 = vmax.f32 %v170, 0.0
    %vm172 = vcmask 130048
    %173 = vst.msk [vmem:[#allocation7] sm:$0xff] %vm172, %v171
    %s174 = scalar_lea.vmem %s0, 8
    %v175 = vld [vmem:[%s174] sm:$0xff]
    %v176 = vld [vmem:[#allocation5] sm:$0xff]
    %v177 = vld [vmem:[%s6] sm:$0xff]
    %179 = vset.pattern.permute.xlu0 0
    %180 = vperm.xlu0 %179, %v177
    %v181 = vpop.permute.xlu0 %180
    %v184 = vsel %vm63, %v176, 0
    %186 = vmatpush.msra.mxu0 0.0
    %187 = vmatpush.msra.mxu0 0.0
    %188 = vmatpush.msra.mxu0 0.0
    %189 = vmatpush.msra.mxu0 0.0
    %190 = vmatpush.msra.mxu0 0.0
    %191 = vmatpush.msra.mxu0 0.0
    %192 = vmatpush.msra.mxu0 0.0
    %193 = vmatpush.msra.mxu0 0.0
    %194 = vmatpush.msra.mxu0 0.0
    %195 = vmatpush.msra.mxu0 0.0
    %196 = vmatpush.msra.mxu0 0.0
    %197 = vmatpush.msra.mxu0 0.0
    %198 = vmatpush.msra.mxu0 0.0
    %199 = vmatpush.msra.mxu0 0.0
    %200 = vmatpush.msra.mxu0 0.0
    %201 = vmatpush.msra.mxu0 %v175
    %202 = vmatmul.f32.gmra.mxu0 %v184
    %v203 = vpop.f32.mrf.mxu0
    %v204 = vadd.f32 %v181, %v203
    %205 = vdwg.mxu0
    %207 = vrot.lane.b32.xlu0 %v175, 1
    %v208 = vpop.permute.xlu0 %207
    %v210 = vsel %vm91, 0.0, %v208
    %211 = vrot.lane.b32.xlu0 %v175, 127
    %v212 = vpop.permute.xlu0 %211
    %v214 = vsel %vm96, %v212, 0.0
    %v215 = vld [vmem:[%s1] sm:$0xff]
    %v216 = vld [vmem:[%s2] sm:$0xff]
    %218 = vset.pattern.permute.xlu0 0
    %219 = vperm.xlu0 %218, %v216
    %v220 = vpop.permute.xlu0 %219
    %v223 = vsel %vm105, %v215, 0
    %225 = vmatpush.msra.mxu0 0.0
    %226 = vmatpush.msra.mxu0 0.0
    %227 = vmatpush.msra.mxu0 0.0
    %228 = vmatpush.msra.mxu0 0.0
    %229 = vmatpush.msra.mxu0 0.0
    %230 = vmatpush.msra.mxu0 0.0
    %231 = vmatpush.msra.mxu0 0.0
    %232 = vmatpush.msra.mxu0 0.0
    %233 = vmatpush.msra.mxu0 0.0
    %234 = vmatpush.msra.mxu0 0.0
    %235 = vmatpush.msra.mxu0 0.0
    %236 = vmatpush.msra.mxu0 0.0
    %237 = vmatpush.msra.mxu0 0.0
    %238 = vmatpush.msra.mxu0 %v214
    %239 = vmatpush.msra.mxu0 %v175
    %240 = vmatpush.msra.mxu0 %v210
    %241 = vmatmul.f32.gmra.mxu0 %v223
    %v242 = vpop.f32.mrf.mxu0
    %v243 = vadd.f32 %v220, %v242
    %244 = vdwg.mxu0
    %v245 = vmax.f32 %v243, 0.0
    %247 = vrot.lane.b32.xlu0 %v245, 1
    %v248 = vpop.permute.xlu0 %247
    %v250 = vsel %vm91, 0.0, %v248
    %251 = vrot.lane.b32.xlu0 %v245, 127
    %v252 = vpop.permute.xlu0 %251
    %v254 = vsel %vm96, %v252, 0.0
    %v255 = vld [vmem:[#allocation2] sm:$0xff]
    %v256 = vld [vmem:[%s4] sm:$0xff]
    %258 = vset.pattern.permute.xlu0 0
    %259 = vperm.xlu0 %258, %v256
    %v260 = vpop.permute.xlu0 %259
    %v263 = vsel %vm105, %v255, 0
    %265 = vmatpush.msra.mxu0 0.0
    %266 = vmatpush.msra.mxu0 0.0
    %267 = vmatpush.msra.mxu0 0.0
    %268 = vmatpush.msra.mxu0 0.0
    %269 = vmatpush.msra.mxu0 0.0
    %270 = vmatpush.msra.mxu0 0.0
    %271 = vmatpush.msra.mxu0 0.0
    %272 = vmatpush.msra.mxu0 0.0
    %273 = vmatpush.msra.mxu0 0.0
    %274 = vmatpush.msra.mxu0 0.0
    %275 = vmatpush.msra.mxu0 0.0
    %276 = vmatpush.msra.mxu0 0.0
    %277 = vmatpush.msra.mxu0 0.0
    %278 = vmatpush.msra.mxu0 %v254
    %279 = vmatpush.msra.mxu0 %v245
    %280 = vmatpush.msra.mxu0 %v250
    %281 = vmatmul.f32.gmra.mxu0 %v263
    %v282 = vpop.f32.mrf.mxu0
    %v283 = vadd.f32 %v260, %v282
    %284 = vdwg.mxu0
    %v285 = vmax.f32 %v283, 0.0
    %v286 = vadd.f32 %v285, %v204
    %v287 = vmax.f32 %v286, 0.0
    %s288 = scalar_lea.vmem [#allocation7], 8
    %289 = vst.msk [vmem:[%s288] sm:$0xff] %vm172, %v287
    // Predicated region
    $region38: #{tpu_custom_call.1} parent=1 // pred_check
      _
    $region39: #{tpu_custom_call.1} parent=1 // pred_check_branch
      %291 = sbr.rel (0) target = $region41
    $region40: #{tpu_custom_call.1} parent=1 // pred_region
      %293 = vsyncadd [#allocation4], 0
      %s294 = sshll.u32 [#allocation7], 4
      %s295 = int_to_ptr.vmem [resolvable:$true] %s294
      %s296 = sshll.u32 %s7, 4
      %s297 = int_to_ptr.hbm [resolvable:$true] %s296
      %302 = dma.vmem_to_hbm [thread:$0]  %s295, 256, %s297, [#allocation4], 128, 128, 8
    $region41: #{tpu_custom_call.1} parent=1 // pred_fallthru
      _
    // Predicated region
    $region42: #{tpu_custom_call.1} parent=1 // pred_check
      _
    $region43: #{tpu_custom_call.1} parent=1 // pred_check_branch
      %304 = sbr.rel (0) target = $region45
    $region44: #{tpu_custom_call.1} parent=1 // pred_region
      %306 = dma.done [#allocation4], 256
    $region45: #{tpu_custom_call.1} parent=1 // pred_fallthru
      _
    %307 = vsyncpa [#allocation3], 1
    %308 = vsyncpa [#allocation6], 1
    %309 = vsyncpa [#allocation4], 1

</llo_original>
